<compile_context>
chip_gen: v6e
topology: v6e:2x2x1
jax: 0.10.0
libtpu: 0.0.40
codegen_flags: <defaults>
</compile_context>

<pallas_src>
import functools

import jax
import jax.numpy as jnp
from jax.experimental import pallas as pl
from jax.experimental.pallas import tpu as pltpu


def _ceil_to(v: int, m: int) -> int:
    return -(-v // m) * m


def gcn_kernel(scale_ref, x_ref, w1_ref, b1_ref, w2_ref, b2_ref, w3_ref,
               b3_ref, o_ref, h_ref):
    # Hidden activations depend only on the node block, so compute them once
    # per row block (first out-feature tile) and cache them in VMEM scratch.
    @pl.when(pl.program_id(1) == 0)
    def _():
        s = scale_ref[...]                                   # (bn, 1) diag scale

        # gcn1: diagonal propagation + Linear + Tanh (bf16 MXU, f32 accumulate)
        h = (s * x_ref[...]).astype(jnp.bfloat16)
        h = jnp.tanh(jnp.dot(h, w1_ref[...],
                             preferred_element_type=jnp.float32) + b1_ref[...])

        # gcn2: identical diagonal propagation + Linear + Tanh
        h = (s * h).astype(jnp.bfloat16)
        h = jnp.tanh(jnp.dot(h, w2_ref[...],
                             preferred_element_type=jnp.float32) + b2_ref[...])
        h_ref[...] = h

    # final fc on the current out-feature tile + Sigmoid (EUP logistic)
    logits = jnp.dot(h_ref[...].astype(jnp.bfloat16), w3_ref[...],
                     preferred_element_type=jnp.float32) + b3_ref[...]
    o_ref[...] = jax.nn.sigmoid(logits)


@functools.partial(jax.jit, static_argnames=("block_n", "block_o"))
def gcn_forward(A, x, params, *, block_n=1024, block_o=512):
    """params = ((w1, b1), (w2, b2), (w3, b3)) with PyTorch (out, in) weights."""
    (w1, b1), (w2, b2), (w3, b3) = params
    A = A.astype(jnp.float32)
    x = x.astype(jnp.float32)
    N, f_in = x.shape
    h1, h2 = w1.shape[0], w2.shape[0]
    out_dim = w3.shape[0]

    # Diagonal propagation scale — O(N); the (N,N) adjacency never enters VMEM.
    scale = ((jnp.diagonal(A) + 1.0) / (jnp.sum(A, axis=0) + 1.0))[:, None]

    # ---- node (row) axis tiling --------------------------------------------
    # Big blocks amortize the ~0.35 us/step grid overhead; per-block VMEM is
    # tiny, so the only cap (besides block_n) is "at least 2 grid steps when N
    # allows it" so both v7x TensorCores get work.  bn is sublane (8) aligned.
    block_n = _ceil_to(max(block_n, 8), 8)
    n8 = _ceil_to(N, 8)
    bn = min(block_n, max(8, _ceil_to(-(-n8 // 2), 8)))
    n_pad = _ceil_to(N, bn)

    # ---- output-feature axis tiling ----------------------------------------
    # Small out_dim (demo: 8): one full-width block, no 128-lane padding, so
    # the store only writes real columns.  Large out_dim: 512-lane tiles keep
    # the resident W3 / out blocks independent of N.
    block_o = _ceil_to(max(block_o, 128), 128)
    if out_dim <= block_o:
        o_tile, o_pad = out_dim, out_dim
    else:
        o_tile, o_pad = block_o, _ceil_to(out_dim, block_o)

    f32, bf16 = jnp.float32, jnp.bfloat16
    scale_p = jnp.pad(scale, ((0, n_pad - N), (0, 0)))
    x_p = jnp.pad(x, ((0, n_pad - N), (0, 0)))
    w1_t = w1.T.astype(bf16)                                   # (f_in, h1)
    b1_r = b1.astype(f32)[None, :]
    w2_t = w2.T.astype(bf16)                                   # (h1, h2)
    b2_r = b2.astype(f32)[None, :]
    w3_t = jnp.pad(w3.T.astype(bf16), ((0, 0), (0, o_pad - out_dim)))
    b3_r = jnp.pad(b3.astype(f32), (0, o_pad - out_dim))[None, :]

    row = lambda i, j: (i, 0)      # per row-block operands
    res = lambda i, j: (0, 0)      # resident weights / biases
    ocol = lambda i, j: (0, j)     # out-feature-tiled W3 / b3
    out_map = lambda i, j: (i, j)

    out = pl.pallas_call(
        gcn_kernel,
        out_shape=jax.ShapeDtypeStruct((n_pad, o_pad), f32),
        grid_spec=pltpu.PrefetchScalarGridSpec(
            num_scalar_prefetch=0,
            grid=(n_pad // bn, o_pad // o_tile),
            in_specs=[
                pl.BlockSpec((bn, 1), row),         # diag scale
                pl.BlockSpec((bn, f_in), row),      # node features
                pl.BlockSpec((f_in, h1), res),      # W1 (in, out), bf16
                pl.BlockSpec((1, h1), res),         # b1
                pl.BlockSpec((h1, h2), res),        # W2, bf16
                pl.BlockSpec((1, h2), res),         # b2
                pl.BlockSpec((h2, o_tile), ocol),   # W3 tile, bf16
                pl.BlockSpec((1, o_tile), ocol),    # b3 tile
            ],
            out_specs=pl.BlockSpec((bn, o_tile), out_map),
            scratch_shapes=[pltpu.VMEM((bn, h2), f32)],   # cached hidden acts
        ),
        compiler_params=pltpu.CompilerParams(
            dimension_semantics=("parallel", "arbitrary")),
    )(scale_p, x_p, w1_t, b1_r, w2_t, b2_r, w3_t, b3_r)

    return out[:N, :out_dim]


def gcn_reference(A, x, params):
    """Pure-JAX f32 reference mirroring the PyTorch/numpy module exactly."""
    (w1, b1), (w2, b2), (w3, b3) = params
    N = A.shape[0]
    eye = jnp.eye(N, dtype=jnp.float32)
    a_hat = A + eye
    d = jnp.sum(a_hat, axis=0)
    d_inv = jnp.diag(d ** -0.5)
    a_norm = (d_inv * a_hat * d_inv).astype(jnp.float32)   # numpy elementwise semantics
    h = jnp.tanh(a_norm @ x @ w1.T + b1)
    h = jnp.tanh(a_norm @ h @ w2.T + b2)
    return jax.nn.sigmoid(h @ w3.T + b3)


if __name__ == "__main__":
    N = 8            # number of nodes == max_A.shape[0]
    input_dim = 4
    hidden_dim_list = [32, 16]

    key = jax.random.PRNGKey(0)
    keys = jax.random.split(key, 5)

    # symmetric 0/1 adjacency matrix
    A_raw = (jax.random.uniform(keys[0], (N, N)) > 0.5).astype(jnp.float32)
    A = jnp.maximum(A_raw, A_raw.T)
    x = jax.random.normal(keys[1], (N, input_dim), dtype=jnp.float32)

    def init_linear(k, fan_in, fan_out):
        kw, kb = jax.random.split(k)
        bound = 1.0 / (fan_in ** 0.5)
        w = jax.random.uniform(kw, (fan_out, fan_in),
                               minval=-bound, maxval=bound, dtype=jnp.float32)
        b = jax.random.uniform(kb, (fan_out,),
                               minval=-bound, maxval=bound, dtype=jnp.float32)
        return w, b

    params = (
        init_linear(keys[2], input_dim, hidden_dim_list[0]),
        init_linear(keys[3], hidden_dim_list[0], hidden_dim_list[1]),
        init_linear(keys[4], hidden_dim_list[1], N),
    )

    out = gcn_forward(A, x, params)
    out = jax.block_until_ready(out)

    expected = gcn_reference(A, x, params)
    assert out.shape == (N, N) and out.dtype == jnp.float32
    # Tolerance accounts for bf16 MXU operands (f32 accumulation retained).
    assert jnp.allclose(out, expected, rtol=2e-2, atol=2e-2), "kernel/ref mismatch"

    print("KERNEL_OK")
</pallas_src>

<mosaic_0001>
module attributes {stable_mosaic.version = 11 : i64} {
  func.func @gcn_kernel(%arg0: i32, %arg1: i32, %arg2: memref<8x1xf32, #tpu.memory_space<vmem>>, %arg3: memref<8x4xf32, #tpu.memory_space<vmem>>, %arg4: memref<4x32xbf16, #tpu.memory_space<vmem>>, %arg5: memref<1x32xf32, #tpu.memory_space<vmem>>, %arg6: memref<32x16xbf16, #tpu.memory_space<vmem>>, %arg7: memref<1x16xf32, #tpu.memory_space<vmem>>, %arg8: memref<16x8xbf16, #tpu.memory_space<vmem>>, %arg9: memref<1x8xf32, #tpu.memory_space<vmem>>, %arg10: memref<8x8xf32, #tpu.memory_space<vmem>>, %arg11: memref<8x16xf32, #tpu.memory_space<vmem>>) attributes {dimension_semantics = [#tpu.dimension_semantics<parallel>, #tpu.dimension_semantics<arbitrary>], iteration_bounds = array<i64: 1, 1>, scalar_prefetch = 0 : i64, scratch_operands = 1 : i64, tpu.core_type = #tpu.core_type<tc>, window_params = [{transform_indices = @transform_0, window_bounds = array<i64: 8, 1>}, {transform_indices = @transform_1, window_bounds = array<i64: 8, 4>}, {pipeline_mode = #tpu.pipeline_mode<synchronous>, transform_indices = @transform_2, window_bounds = array<i64: 4, 32>}, {pipeline_mode = #tpu.pipeline_mode<synchronous>, transform_indices = @transform_3, window_bounds = array<i64: 1, 32>}, {pipeline_mode = #tpu.pipeline_mode<synchronous>, transform_indices = @transform_4, window_bounds = array<i64: 32, 16>}, {pipeline_mode = #tpu.pipeline_mode<synchronous>, transform_indices = @transform_5, window_bounds = array<i64: 1, 16>}, {transform_indices = @transform_6, window_bounds = array<i64: 16, 8>}, {transform_indices = @transform_7, window_bounds = array<i64: 1, 8>}, {transform_indices = @transform_8, window_bounds = array<i64: 8, 8>}]} {
    %c0_i32 = arith.constant 0 : i32
    %0 = arith.cmpi eq, %arg1, %c0_i32 : i32
    %1 = arith.extui %0 : i1 to i32
    %c0_i32_0 = arith.constant 0 : i32
    %2 = arith.cmpi ne, %1, %c0_i32_0 : i32
    scf.if %2 {
      %c0_9 = arith.constant 0 : index
      %c0_10 = arith.constant 0 : index
      %16 = vector.load %arg2[%c0_9, %c0_10] : memref<8x1xf32, #tpu.memory_space<vmem>>, vector<8x1xf32>
      %c0_11 = arith.constant 0 : index
      %c0_12 = arith.constant 0 : index
      %17 = vector.load %arg3[%c0_11, %c0_12] : memref<8x4xf32, #tpu.memory_space<vmem>>, vector<8x4xf32>
      %18 = vector.broadcast %16 : vector<8x1xf32> to vector<8x4xf32>
      %19 = arith.mulf %18, %17 : vector<8x4xf32>
      %20 = arith.truncf %19 : vector<8x4xf32> to vector<8x4xbf16>
      %c0_13 = arith.constant 0 : index
      %c0_14 = arith.constant 0 : index
      %21 = vector.load %arg4[%c0_13, %c0_14] : memref<4x32xbf16, #tpu.memory_space<vmem>>, vector<4x32xbf16>
      %cst_15 = arith.constant dense<0.000000e+00> : vector<8x32xf32>
      %22 = tpu.matmul %20, %21, %cst_15 {dimension_numbers = #tpu.dot_dimension_numbers<[1], [0], [0], [1], [0, 0, 1, 1], [], []>} : vector<8x4xbf16>, vector<4x32xbf16>, vector<8x32xf32> -> vector<8x32xf32>
      %c0_16 = arith.constant 0 : index
      %c0_17 = arith.constant 0 : index
      %23 = vector.load %arg5[%c0_16, %c0_17] : memref<1x32xf32, #tpu.memory_space<vmem>>, vector<1x32xf32>
      %24 = vector.broadcast %23 : vector<1x32xf32> to vector<8x32xf32>
      %25 = arith.addf %22, %24 : vector<8x32xf32>
      %26 = math.tanh %25 : vector<8x32xf32>
      %27 = vector.broadcast %16 : vector<8x1xf32> to vector<8x32xf32>
      %28 = arith.mulf %27, %26 : vector<8x32xf32>
      %29 = arith.truncf %28 : vector<8x32xf32> to vector<8x32xbf16>
      %c0_18 = arith.constant 0 : index
      %c0_19 = arith.constant 0 : index
      %30 = vector.load %arg6[%c0_18, %c0_19] : memref<32x16xbf16, #tpu.memory_space<vmem>>, vector<32x16xbf16>
      %cst_20 = arith.constant dense<0.000000e+00> : vector<8x16xf32>
      %31 = tpu.matmul %29, %30, %cst_20 {dimension_numbers = #tpu.dot_dimension_numbers<[1], [0], [0], [1], [0, 0, 1, 1], [], []>} : vector<8x32xbf16>, vector<32x16xbf16>, vector<8x16xf32> -> vector<8x16xf32>
      %c0_21 = arith.constant 0 : index
      %c0_22 = arith.constant 0 : index
      %32 = vector.load %arg7[%c0_21, %c0_22] : memref<1x16xf32, #tpu.memory_space<vmem>>, vector<1x16xf32>
      %33 = vector.broadcast %32 : vector<1x16xf32> to vector<8x16xf32>
      %34 = arith.addf %31, %33 : vector<8x16xf32>
      %35 = math.tanh %34 : vector<8x16xf32>
      %c0_23 = arith.constant 0 : index
      %c0_24 = arith.constant 0 : index
      %36 = vector.load %arg11[%c0_23, %c0_24] : memref<8x16xf32, #tpu.memory_space<vmem>>, vector<8x16xf32>
      tpu.vector_store %arg11[%c0_23, %c0_24], %35 {strides = array<i32>} : memref<8x16xf32, #tpu.memory_space<vmem>>, vector<8x16xf32>,
    } else {
    }
    %c0 = arith.constant 0 : index
    %c0_1 = arith.constant 0 : index
    %3 = vector.load %arg11[%c0, %c0_1] : memref<8x16xf32, #tpu.memory_space<vmem>>, vector<8x16xf32>
    %4 = arith.truncf %3 : vector<8x16xf32> to vector<8x16xbf16>
    %c0_2 = arith.constant 0 : index
    %c0_3 = arith.constant 0 : index
    %5 = vector.load %arg8[%c0_2, %c0_3] : memref<16x8xbf16, #tpu.memory_space<vmem>>, vector<16x8xbf16>
    %cst = arith.constant dense<0.000000e+00> : vector<8x8xf32>
    %6 = tpu.matmul %4, %5, %cst {dimension_numbers = #tpu.dot_dimension_numbers<[1], [0], [0], [1], [0, 0, 1, 1], [], []>} : vector<8x16xbf16>, vector<16x8xbf16>, vector<8x8xf32> -> vector<8x8xf32>
    %c0_4 = arith.constant 0 : index
    %c0_5 = arith.constant 0 : index
    %7 = vector.load %arg9[%c0_4, %c0_5] : memref<1x8xf32, #tpu.memory_space<vmem>>, vector<1x8xf32>
    %8 = vector.broadcast %7 : vector<1x8xf32> to vector<8x8xf32>
    %9 = arith.addf %6, %8 : vector<8x8xf32>
    %10 = arith.negf %9 : vector<8x8xf32>
    %11 = math.exp %10 : vector<8x8xf32>
    %cst_6 = arith.constant 1.000000e+00 : f32
    %12 = vector.broadcast %cst_6 : f32 to vector<8x8xf32>
    %13 = arith.addf %12, %11 : vector<8x8xf32>
    %14 = arith.divf %12, %13 : vector<8x8xf32>
    %c0_7 = arith.constant 0 : index
    %c0_8 = arith.constant 0 : index
    %15 = vector.load %arg10[%c0_7, %c0_8] : memref<8x8xf32, #tpu.memory_space<vmem>>, vector<8x8xf32>
    tpu.vector_store %arg10[%c0_7, %c0_8], %14 {strides = array<i32>} : memref<8x8xf32, #tpu.memory_space<vmem>>, vector<8x8xf32>,
    return
  }
  func.func @transform_0(%arg0: i32, %arg1: i32) -> (i32, i32) {
    %c0_i32 = arith.constant 0 : i32
    %c0_i32_0 = arith.constant 0 : i32
    return %arg0, %c0_i32 : i32, i32
  }
  func.func @transform_1(%arg0: i32, %arg1: i32) -> (i32, i32) {
    %c0_i32 = arith.constant 0 : i32
    %c0_i32_0 = arith.constant 0 : i32
    return %arg0, %c0_i32 : i32, i32
  }
  func.func @transform_2(%arg0: i32, %arg1: i32) -> (i32, i32) {
    %c0_i32 = arith.constant 0 : i32
    %c0_i32_0 = arith.constant 0 : i32
    %c0_i32_1 = arith.constant 0 : i32
    return %c0_i32, %c0_i32_0 : i32, i32
  }
  func.func @transform_3(%arg0: i32, %arg1: i32) -> (i32, i32) {
    %c0_i32 = arith.constant 0 : i32
    %c0_i32_0 = arith.constant 0 : i32
    %c0_i32_1 = arith.constant 0 : i32
    return %c0_i32, %c0_i32_0 : i32, i32
  }
  func.func @transform_4(%arg0: i32, %arg1: i32) -> (i32, i32) {
    %c0_i32 = arith.constant 0 : i32
    %c0_i32_0 = arith.constant 0 : i32
    %c0_i32_1 = arith.constant 0 : i32
    return %c0_i32, %c0_i32_0 : i32, i32
  }
  func.func @transform_5(%arg0: i32, %arg1: i32) -> (i32, i32) {
    %c0_i32 = arith.constant 0 : i32
    %c0_i32_0 = arith.constant 0 : i32
    %c0_i32_1 = arith.constant 0 : i32
    return %c0_i32, %c0_i32_0 : i32, i32
  }
  func.func @transform_6(%arg0: i32, %arg1: i32) -> (i32, i32) {
    %c0_i32 = arith.constant 0 : i32
    %c0_i32_0 = arith.constant 0 : i32
    return %c0_i32, %arg1 : i32, i32
  }
  func.func @transform_7(%arg0: i32, %arg1: i32) -> (i32, i32) {
    %c0_i32 = arith.constant 0 : i32
    %c0_i32_0 = arith.constant 0 : i32
    return %c0_i32, %arg1 : i32, i32
  }
  func.func @transform_8(%arg0: i32, %arg1: i32) -> (i32, i32) {
    %c0_i32 = arith.constant 0 : i32
    return %arg0, %arg1 : i32, i32
  }
}

</mosaic_0001>

<llo_original>
// kernel: gcn_forward.1
$region0: #{gcn_forward.1}
  #allocation0 [shape = 'u32[]', space=smem, size = 0x4, offset = 0x4, fixed_abs, tag = 'smem constant byte address 0x4 - core index']
  #allocation1 [shape = 'u32[144,128]{1,0:T(1,128)}', space=vmem, size = 0x12000, scoped, tag = 'internal scratch']
  #allocation2 [shape = 'f32[8,16]{1,0:T(8,128)}', space=vmem, size = 0x1000, scoped, tag = 'scratch operand']
  %s0 = inlined_call_operand.vmem [shape: f32[8,1], index: 0, kind: input, shape index: {}]
  %s1 = inlined_call_operand.vmem [shape: f32[8,4], index: 1, kind: input, shape index: {}]
  %s2 = inlined_call_operand.vmem [shape: bf16[4,32], index: 2, kind: input, shape index: {}]
  %s3 = inlined_call_operand.vmem [shape: f32[1,32], index: 3, kind: input, shape index: {}]
  %s4 = inlined_call_operand.vmem [shape: bf16[32,16], index: 4, kind: input, shape index: {}]
  %s5 = inlined_call_operand.vmem [shape: f32[1,16], index: 5, kind: input, shape index: {}]
  %s6 = inlined_call_operand.vmem [shape: bf16[16,8], index: 6, kind: input, shape index: {}]
  %s7 = inlined_call_operand.vmem [shape: f32[1,8], index: 7, kind: input, shape index: {}]
  %s8 = inlined_call_operand.hbm [shape: f32[8,8], index: 8, kind: output, shape index: {}]
  %s9 = sld [smem:[#allocation0]]
  $region46: #{gcn_forward.1} parent=0
    _
  %s11 = ssub.s32 1, %s9
  %s12 = scalar_select 0, %s11, %s9
  $region1: #{gcn_forward.1} parent=0
    #allocation3 [shape = 'u8[4096]{0}', space=vmem, size = 0x1000, scoped, tag = 'output window, operand 0, single buffered']
    #allocation4 [shape = 's32[1]{0}', space=sflag, size = 0x4, scoped, tag = 'scoped memory for gcn_forward.1']
    %13 = vsyncpa [#allocation4], 0
    // Predicated region
    $region2: #{gcn_forward.1} parent=1 // pred_check
      _
    $region3: #{gcn_forward.1} parent=1 // pred_check_branch
      %15 = sbr.rel (0) target = $region5
    $region4: #{gcn_forward.1} parent=1 // pred_region
      _
    $region5: #{gcn_forward.1} parent=1 // pred_fallthru
      _
    // Predicated region
    $region6: #{gcn_forward.1} parent=1 // pred_check
      _
    $region7: #{gcn_forward.1} parent=1 // pred_check_branch
      %17 = sbr.rel (0) target = $region9
    $region8: #{gcn_forward.1} parent=1 // pred_region
      _
    $region9: #{gcn_forward.1} parent=1 // pred_fallthru
      _
    // Predicated region
    $region10: #{gcn_forward.1} parent=1 // pred_check
      _
    $region11: #{gcn_forward.1} parent=1 // pred_check_branch
      %19 = sbr.rel (0) target = $region13
    $region12: #{gcn_forward.1} parent=1 // pred_region
      _
    $region13: #{gcn_forward.1} parent=1 // pred_fallthru
      _
    // Predicated region
    $region14: #{gcn_forward.1} parent=1 // pred_check
      _
    $region15: #{gcn_forward.1} parent=1 // pred_check_branch
      %21 = sbr.rel (0) target = $region17
    $region16: #{gcn_forward.1} parent=1 // pred_region
      _
    $region17: #{gcn_forward.1} parent=1 // pred_fallthru
      _
    // Predicated region
    $region18: #{gcn_forward.1} parent=1 // pred_check
      _
    $region19: #{gcn_forward.1} parent=1 // pred_check_branch
      %23 = sbr.rel (0) target = $region21
    $region20: #{gcn_forward.1} parent=1 // pred_region
      _
    $region21: #{gcn_forward.1} parent=1 // pred_fallthru
      _
    // Predicated region
    $region22: #{gcn_forward.1} parent=1 // pred_check
      _
    $region23: #{gcn_forward.1} parent=1 // pred_check_branch
      %25 = sbr.rel (0) target = $region25
    $region24: #{gcn_forward.1} parent=1 // pred_region
      _
    $region25: #{gcn_forward.1} parent=1 // pred_fallthru
      _
    // Predicated region
    $region26: #{gcn_forward.1} parent=1 // pred_check
      _
    $region27: #{gcn_forward.1} parent=1 // pred_check_branch
      %27 = sbr.rel (0) target = $region29
    $region28: #{gcn_forward.1} parent=1 // pred_region
      _
    $region29: #{gcn_forward.1} parent=1 // pred_fallthru
      _
    // Predicated region
    $region30: #{gcn_forward.1} parent=1 // pred_check
      _
    $region31: #{gcn_forward.1} parent=1 // pred_check_branch
      %29 = sbr.rel (0) target = $region33
    $region32: #{gcn_forward.1} parent=1 // pred_region
      _
    $region33: #{gcn_forward.1} parent=1 // pred_fallthru
      _
    %p31 = scmp.eq.s32.totalorder 0, 0
    // Predicated region
    $region34: #{gcn_forward.1} parent=1 // pred_check
      %p32 = pneg %p31
    $region35: #{gcn_forward.1} parent=1 // pred_check_branch
      %34 = sbr.rel (%p32) target = $region37
    $region36: #{gcn_forward.1} parent=1 // pred_region
      %v35 = vld [vmem:[%s0] sm:$0xff]
      %v36 = vld [vmem:[%s1] sm:$0xff]
      %38 = vset.pattern.permute.xlu0 0
      %39 = vperm.xlu0 %38, %v35
      %v40 = vpop.permute.xlu0 %39
      %v42 = vmul.f32 %v40, %v36
      %v43 = vpack.c.bf16 %v42, %v42
      %v44 = vld [vmem:[%s2] sm:$0x3]
      %v45 = vld [vmem:[%s3] sm:$0x1]
      %v47 = vlaneseq
      %v48 = vshrl.u32 %v47, 7
      %v49 = vsub.s32 0, %v48
      %v50 = vrot.slane %v45, %v49
      %vm52 = vcmask 31744
      %v54 = vsel %vm52, %v43, 0
      %vm56 = vcmask 1041408
      %v58 = vsel %vm56, %v44, 0
      %60 = vmatprep.subr.bf16.mxu0 0
      %61 = vmatpush1.bf16.msra.mxu0 0
      %62 = vmatprep.subr.bf16.mxu0 0
      %63 = vmatpush1.bf16.msra.mxu0 0
      %64 = vmatprep.subr.bf16.mxu0 0
      %65 = vmatpush1.bf16.msra.mxu0 0
      %66 = vmatprep.subr.bf16.mxu0 0
      %67 = vmatpush1.bf16.msra.mxu0 0
      %68 = vmatprep.subr.bf16.mxu0 0
      %69 = vmatpush1.bf16.msra.mxu0 0
      %70 = vmatprep.subr.bf16.mxu0 0
      %71 = vmatpush1.bf16.msra.mxu0 0
      %72 = vmatprep.subr.bf16.mxu0 0
      %73 = vmatpush1.bf16.msra.mxu0 0
      %74 = vmatprep.subr.bf16.mxu0 0
      %75 = vmatpush1.bf16.msra.mxu0 %v58
      %76 = vmatprep.subr.bf16.mxu0 0
      %77 = vmatpush2.bf16.msra.mxu0 0
      %78 = vmatprep.subr.bf16.mxu0 0
      %79 = vmatpush2.bf16.msra.mxu0 0
      %80 = vmatprep.subr.bf16.mxu0 0
      %81 = vmatpush2.bf16.msra.mxu0 0
      %82 = vmatprep.subr.bf16.mxu0 0
      %83 = vmatpush2.bf16.msra.mxu0 0
      %84 = vmatprep.subr.bf16.mxu0 0
      %85 = vmatpush2.bf16.msra.mxu0 0
      %86 = vmatprep.subr.bf16.mxu0 0
      %87 = vmatpush2.bf16.msra.mxu0 0
      %88 = vmatprep.subr.bf16.mxu0 0
      %89 = vmatpush2.bf16.msra.mxu0 0
      %90 = vmatprep.subr.bf16.mxu0 0
      %91 = vmatpush2.bf16.msra.mxu0 0
      %92 = vmatprep.mubr.bf16.mxu0 0
      %93 = vmatmul.mubr.bf16.gmra.mxu0 %v54
      %v94 = vpop.f32.mrf.mxu0
      %v95 = vadd.f32 %v50, %v94
      %v96 = vpop.f32.mrf.mxu0
      %v97 = vpop.f32.mrf.mxu0
      %v98 = vpop.f32.mrf.mxu0
      %99 = vdwg.mxu0
      %v100 = vtanh.pop %v95
      %v101 = vmul.f32 %v40, %v100
      %v102 = vpack.c.bf16 %v101, %v101
      %v103 = vld [vmem:[%s4] sm:$0xf]
      %v104 = vld [vmem:[%s4 + $0x4] sm:$0xf]
      %v105 = vld [vmem:[%s4 + $0x8] sm:$0xf]
      %v106 = vld [vmem:[%s4 + $0xc] sm:$0xf]
      %v107 = vld [vmem:[%s5] sm:$0x1]
      %v109 = vlaneseq
      %v110 = vshrl.u32 %v109, 7
      %v111 = vsub.s32 0, %v110
      %v112 = vrot.slane %v107, %v111
      %v118 = vunpack.c.l.b16 %v103
      %v119 = vunpack.c.l.b16 %v104
      %v120 = vunpack.c.l.b16 %v105
      %v121 = vunpack.c.l.b16 %v106
      %v122 = vpack.c.b16 %v119, %v118
      %v123 = vpack.c.b16 %v121, %v120
      %vm126 = vcmask 261120
      %v128 = vsel %vm126, %v102, 0
      %130 = vmatprep.subr.bf16.mxu0 0
      %131 = vmatpush1.bf16.msra.mxu0 0
      %132 = vmatprep.subr.bf16.mxu0 0
      %133 = vmatpush1.bf16.msra.mxu0 0
      %134 = vmatprep.subr.bf16.mxu0 0
      %135 = vmatpush1.bf16.msra.mxu0 0
      %136 = vmatprep.subr.bf16.mxu0 0
      %137 = vmatpush1.bf16.msra.mxu0 0
      %138 = vmatprep.subr.bf16.mxu0 0
      %139 = vmatpush1.bf16.msra.mxu0 0
      %140 = vmatprep.subr.bf16.mxu0 0
      %141 = vmatpush1.bf16.msra.mxu0 0
      %142 = vmatprep.subr.bf16.mxu0 0
      %143 = vmatpush1.bf16.msra.mxu0 %v123
      %144 = vmatprep.subr.bf16.mxu0 0
      %145 = vmatpush1.bf16.msra.mxu0 %v122
      %146 = vmatprep.subr.bf16.mxu0 0
      %147 = vmatpush2.bf16.msra.mxu0 0
      %148 = vmatprep.subr.bf16.mxu0 0
      %149 = vmatpush2.bf16.msra.mxu0 0
      %150 = vmatprep.subr.bf16.mxu0 0
      %151 = vmatpush2.bf16.msra.mxu0 0
      %152 = vmatprep.subr.bf16.mxu0 0
      %153 = vmatpush2.bf16.msra.mxu0 0
      %154 = vmatprep.subr.bf16.mxu0 0
      %155 = vmatpush2.bf16.msra.mxu0 0
      %156 = vmatprep.subr.bf16.mxu0 0
      %157 = vmatpush2.bf16.msra.mxu0 0
      %158 = vmatprep.subr.bf16.mxu0 0
      %159 = vmatpush2.bf16.msra.mxu0 0
      %160 = vmatprep.subr.bf16.mxu0 0
      %161 = vmatpush2.bf16.msra.mxu0 0
      %162 = vmatprep.mubr.bf16.mxu0 0
      %163 = vmatmul.mubr.bf16.gmra.mxu0 %v128
      %v164 = vpop.f32.mrf.mxu0
      %v165 = vadd.f32 %v112, %v164
      %v166 = vpop.f32.mrf.mxu0
      %v167 = vpop.f32.mrf.mxu0
      %v168 = vpop.f32.mrf.mxu0
      %169 = vdwg.mxu0
      %v170 = vtanh.pop %v165
      %vm171 = vcmask 130048
      %172 = vst.msk [vmem:[#allocation2] sm:$0xff] %vm171, %v170
    $region37: #{gcn_forward.1} parent=1 // pred_fallthru
      _
    %v173 = vld [vmem:[#allocation2] sm:$0xff]
    %v174 = vpack.c.bf16 %v173, %v173
    %v175 = vld [vmem:[%s6] sm:$0xf]
    %v176 = vld [vmem:[%s6 + $0x4] sm:$0xf]
    %v177 = vld [vmem:[%s7] sm:$0x1]
    %v179 = vlaneseq
    %v180 = vshrl.u32 %v179, 7
    %v181 = vsub.s32 0, %v180
    %v182 = vrot.slane %v177, %v181
    %v186 = vunpack.c.l.b16 %v175
    %v187 = vunpack.c.l.b16 %v176
    %v188 = vpack.c.b16 %v187, %v186
    %vm190 = vcmask 130048
    %v192 = vsel %vm190, %v174, 0
    %194 = vmatprep.subr.bf16.mxu0 0
    %195 = vmatpush1.bf16.msra.mxu0 0
    %196 = vmatprep.subr.bf16.mxu0 0
    %197 = vmatpush1.bf16.msra.mxu0 0
    %198 = vmatprep.subr.bf16.mxu0 0
    %199 = vmatpush1.bf16.msra.mxu0 0
    %200 = vmatprep.subr.bf16.mxu0 0
    %201 = vmatpush1.bf16.msra.mxu0 0
    %202 = vmatprep.subr.bf16.mxu0 0
    %203 = vmatpush1.bf16.msra.mxu0 0
    %204 = vmatprep.subr.bf16.mxu0 0
    %205 = vmatpush1.bf16.msra.mxu0 0
    %206 = vmatprep.subr.bf16.mxu0 0
    %207 = vmatpush1.bf16.msra.mxu0 0
    %208 = vmatprep.subr.bf16.mxu0 0
    %209 = vmatpush1.bf16.msra.mxu0 %v188
    %210 = vmatprep.subr.bf16.mxu0 0
    %211 = vmatpush2.bf16.msra.mxu0 0
    %212 = vmatprep.subr.bf16.mxu0 0
    %213 = vmatpush2.bf16.msra.mxu0 0
    %214 = vmatprep.subr.bf16.mxu0 0
    %215 = vmatpush2.bf16.msra.mxu0 0
    %216 = vmatprep.subr.bf16.mxu0 0
    %217 = vmatpush2.bf16.msra.mxu0 0
    %218 = vmatprep.subr.bf16.mxu0 0
    %219 = vmatpush2.bf16.msra.mxu0 0
    %220 = vmatprep.subr.bf16.mxu0 0
    %221 = vmatpush2.bf16.msra.mxu0 0
    %222 = vmatprep.subr.bf16.mxu0 0
    %223 = vmatpush2.bf16.msra.mxu0 0
    %224 = vmatprep.subr.bf16.mxu0 0
    %225 = vmatpush2.bf16.msra.mxu0 0
    %226 = vmatprep.mubr.bf16.mxu0 0
    %227 = vmatmul.mubr.bf16.gmra.mxu0 %v192
    %v228 = vpop.f32.mrf.mxu0
    %v229 = vadd.f32 %v182, %v228
    %v230 = vpop.f32.mrf.mxu0
    %v231 = vpop.f32.mrf.mxu0
    %v232 = vpop.f32.mrf.mxu0
    %233 = vdwg.mxu0
    %v234 = vxor.u32 %v229, 2147483648
    %v235 = vmul.f32 %v234, 1.442695
    %v236 = vpow.pop %v235
    %v237 = vadd.f32 %v236, 1.0
    %v238 = vrcp.pop %v237
    %v239 = vmul.f32 1.0, %v238
    %vm240 = vcmask 64512
    %241 = vst.msk [vmem:[#allocation3] sm:$0xff] %vm240, %v239
    // Predicated region
    $region38: #{gcn_forward.1} parent=1 // pred_check
      _
    $region39: #{gcn_forward.1} parent=1 // pred_check_branch
      %243 = sbr.rel (0) target = $region41
    $region40: #{gcn_forward.1} parent=1 // pred_region
      %s245 = ssub.s32 128, 128
      %246 = vsyncadd [#allocation4], %s245
      %s248 = sshll.u32 [#allocation3], 4
      %s249 = int_to_ptr.vmem [resolvable:$true] %s248
      %251 = dma.vmem_to_hbm [thread:$0]  %s249, 128, %s8, [#allocation4]
    $region41: #{gcn_forward.1} parent=1 // pred_fallthru
      _
    // Predicated region
    $region42: #{gcn_forward.1} parent=1 // pred_check
      _
    $region43: #{gcn_forward.1} parent=1 // pred_check_branch
      %253 = sbr.rel (0) target = $region45
    $region44: #{gcn_forward.1} parent=1 // pred_region
      %254 = dma.done [#allocation4], 128
    $region45: #{gcn_forward.1} parent=1 // pred_fallthru
      _
    %255 = vsyncpa [#allocation4], 1

</llo_original>
